<compile_context>
chip_gen: v5e
topology: v5e:2x2
jax: 0.10.0
libtpu: 0.0.40
codegen_flags: <defaults>
</compile_context>

<pallas_src>
import functools

import jax
import jax.numpy as jnp
from jax.experimental import pallas as pl
from jax.experimental.pallas import tpu as pltpu

_NEG_FILL = -1e30  # bias for padded logit columns -> exp() underflows to exactly 0


def _round_up(x, m):
    return ((x + m - 1) // m) * m


def _cdiv(a, b):
    return -(-a // b)


def policy_kernel(x_ref, w1_ref, b1_ref, w2_ref, b2_ref, w3_ref, b3_ref, out_ref):
    # In-kernel cast of the f32 activation tile to the matmul dtype (bf16).
    x = x_ref[...].astype(w1_ref.dtype)
    # --- fc1 + relu (bf16 MXU inputs, f32 accumulate, f32 bias/relu) ---
    h1 = jnp.dot(x, w1_ref[...], preferred_element_type=jnp.float32) + b1_ref[...]
    h1 = jnp.maximum(h1, 0.0).astype(w2_ref.dtype)
    # --- fc2 + relu ---
    h2 = jnp.dot(h1, w2_ref[...], preferred_element_type=jnp.float32) + b2_ref[...]
    h2 = jnp.maximum(h2, 0.0).astype(w3_ref.dtype)
    # --- prob layer (logits); padded columns carry a -1e30 bias ---
    logits = jnp.dot(h2, w3_ref[...], preferred_element_type=jnp.float32) + b3_ref[...]
    # --- numerically stable softmax over the lane-dense 128-wide last dim ---
    m = jnp.max(logits, axis=-1, keepdims=True)
    e = jnp.exp(logits - m)                       # padded cols -> exp(-huge) == 0
    denom = jnp.sum(e, axis=-1, keepdims=True)
    out_ref[...] = (e / denom).astype(out_ref.dtype)   # exact normalization


def prepare_params(params, compute_dtype=jnp.bfloat16):
    """One-time prep: transpose PyTorch (out,in) weights to (in,out), pad feature
    dims up to multiples of 128 lanes, cast matmul operands to compute_dtype.
    Biases stay f32; padded prob-bias columns are filled with -1e30."""
    fc1_out, state_dim = params["fc1_w"].shape
    fc2_out = params["fc2_w"].shape[0]
    action_dim = params["prob_w"].shape[0]

    h1p = _round_up(fc1_out, 128)
    h2p = _round_up(fc2_out, 128)
    ap = _round_up(action_dim, 128)

    def pad2(a, rows, cols, fill=0.0):
        return jnp.pad(a, ((0, rows - a.shape[0]), (0, cols - a.shape[1])),
                       constant_values=fill)

    w1 = pad2(params["fc1_w"].T, state_dim, h1p).astype(compute_dtype)
    b1 = jnp.pad(params["fc1_b"], (0, h1p - fc1_out))[None, :].astype(jnp.float32)
    w2 = pad2(params["fc2_w"].T, h1p, h2p).astype(compute_dtype)
    b2 = jnp.pad(params["fc2_b"], (0, h2p - fc2_out))[None, :].astype(jnp.float32)
    w3 = pad2(params["prob_w"].T, h2p, ap).astype(compute_dtype)
    b3 = jnp.pad(params["prob_b"], (0, ap - action_dim),
                 constant_values=_NEG_FILL)[None, :].astype(jnp.float32)
    return {"w1": w1, "b1": b1, "w2": w2, "b2": b2, "w3": w3, "b3": b3}


def _batch_tiling(B, block_b, sublane=16):
    """Pick (tile_rows, padded_batch).
      * tile = ceil(B / n_tiles) rounded up to 16 sublanes (full bf16 vreg pack)
      * at least 2 tiles once B > 32 so "parallel" can shard across v7x's 2 TCs
      * tile capped near block_b to amortize per-grid-step overhead without
        padding B up to a whole huge block."""
    n_tiles = max(1, _cdiv(B, block_b))
    if n_tiles == 1 and B > 32:
        n_tiles = 2
    tb = _round_up(_cdiv(B, n_tiles), sublane)
    b_pad = _round_up(B, tb)
    return tb, b_pad


@functools.partial(jax.jit, static_argnames=("action_dim", "block_b"))
def policy_forward(state, prepped, *, action_dim, block_b=2048):
    """state: (B, state_dim) f32.  prepped: output of prepare_params."""
    B, state_dim = state.shape
    w1, b1 = prepped["w1"], prepped["b1"]
    w2, b2 = prepped["w2"], prepped["b2"]
    w3, b3 = prepped["w3"], prepped["b3"]
    h1p, h2p, ap = w1.shape[1], w2.shape[1], w3.shape[1]

    tb, b_pad = _batch_tiling(B, block_b)
    x = state
    if b_pad != B:
        x = jnp.pad(x, ((0, b_pad - B), (0, 0)))

    resident = lambda i: (0, 0)  # weights/biases: same block every step -> stay in VMEM
    out = pl.pallas_call(
        policy_kernel,
        out_shape=jax.ShapeDtypeStruct((b_pad, ap), jnp.bfloat16),  # bf16 writeback
        grid=(b_pad // tb,),
        in_specs=[
            pl.BlockSpec((tb, state_dim), lambda i: (i, 0)),   # x: streamed f32 tile
            pl.BlockSpec((state_dim, h1p), resident),          # w1
            pl.BlockSpec((1, h1p), resident),                  # b1
            pl.BlockSpec((h1p, h2p), resident),                # w2
            pl.BlockSpec((1, h2p), resident),                  # b2
            pl.BlockSpec((h2p, ap), resident),                 # w3
            pl.BlockSpec((1, ap), resident),                   # b3
        ],
        out_specs=pl.BlockSpec((tb, ap), lambda i: (i, 0)),    # lane-dense output
        compiler_params=pltpu.CompilerParams(
            dimension_semantics=("parallel",)),                # shard batch tiles on v7x
    )(x, w1, b1, w2, b2, w3, b3)
    # Slice padded rows/cols and widen to f32 in one fused XLA op.
    return out[:B, :action_dim].astype(jnp.float32)


def init_params(key, state_dim, fc1_dim, fc2_dim, action_dim):
    """Deterministic init mimicking nn.Linear default (U[-1/sqrt(fan_in), 1/sqrt(fan_in)])."""
    ks = jax.random.split(key, 6)

    def lin(kw, kb, fan_in, fan_out):
        bound = 1.0 / jnp.sqrt(fan_in)
        w = jax.random.uniform(kw, (fan_out, fan_in), jnp.float32, -bound, bound)
        b = jax.random.uniform(kb, (fan_out,), jnp.float32, -bound, bound)
        return w, b

    fc1_w, fc1_b = lin(ks[0], ks[1], state_dim, fc1_dim)
    fc2_w, fc2_b = lin(ks[2], ks[3], fc1_dim, fc2_dim)
    prob_w, prob_b = lin(ks[4], ks[5], fc2_dim, action_dim)
    return {
        "fc1_w": fc1_w, "fc1_b": fc1_b,
        "fc2_w": fc2_w, "fc2_b": fc2_b,
        "prob_w": prob_w, "prob_b": prob_b,
    }


def reference_forward(state, params):
    h1 = jnp.maximum(state @ params["fc1_w"].T + params["fc1_b"], 0.0)
    h2 = jnp.maximum(h1 @ params["fc2_w"].T + params["fc2_b"], 0.0)
    logits = h2 @ params["prob_w"].T + params["prob_b"]
    return jax.nn.softmax(logits, axis=-1)


if __name__ == "__main__":
    batch = 8
    state_dim = 32
    fc1_dim = 64
    fc2_dim = 64
    action_dim = 8

    key = jax.random.PRNGKey(0)
    k_state, k_params = jax.random.split(key)
    state = jax.random.normal(k_state, (batch, state_dim), jnp.float32)
    params = init_params(k_params, state_dim, fc1_dim, fc2_dim, action_dim)

    prepped = prepare_params(params)                      # one-time layout/cast
    prob = policy_forward(state, prepped, action_dim=action_dim)
    prob = jax.block_until_ready(prob)

    ref = reference_forward(state, params)
    assert prob.shape == (batch, action_dim)
    # bf16 matmul inputs / bf16 output store -> loosened tolerances vs f32 reference.
    assert jnp.allclose(jnp.sum(prob, axis=-1), 1.0, atol=1e-2)
    assert jnp.allclose(prob, ref, atol=2e-2, rtol=2e-2)

    print("KERNEL_OK")
</pallas_src>

<mosaic_0001>
module attributes {stable_mosaic.version = 11 : i64} {
  func.func @policy_kernel(%arg0: i32, %arg1: memref<16x32xf32, #tpu.memory_space<vmem>>, %arg2: memref<32x128xbf16, #tpu.memory_space<vmem>>, %arg3: memref<1x128xf32, #tpu.memory_space<vmem>>, %arg4: memref<128x128xbf16, #tpu.memory_space<vmem>>, %arg5: memref<1x128xf32, #tpu.memory_space<vmem>>, %arg6: memref<128x128xbf16, #tpu.memory_space<vmem>>, %arg7: memref<1x128xf32, #tpu.memory_space<vmem>>, %arg8: memref<16x128xbf16, #tpu.memory_space<vmem>>) attributes {dimension_semantics = [#tpu.dimension_semantics<parallel>], iteration_bounds = array<i64: 1>, scalar_prefetch = 0 : i64, scratch_operands = 0 : i64, tpu.core_type = #tpu.core_type<tc>, window_params = [{transform_indices = @transform_0, window_bounds = array<i64: 16, 32>}, {pipeline_mode = #tpu.pipeline_mode<synchronous>, transform_indices = @transform_1, window_bounds = array<i64: 32, 128>}, {pipeline_mode = #tpu.pipeline_mode<synchronous>, transform_indices = @transform_2, window_bounds = array<i64: 1, 128>}, {pipeline_mode = #tpu.pipeline_mode<synchronous>, transform_indices = @transform_3, window_bounds = array<i64: 128, 128>}, {pipeline_mode = #tpu.pipeline_mode<synchronous>, transform_indices = @transform_4, window_bounds = array<i64: 1, 128>}, {pipeline_mode = #tpu.pipeline_mode<synchronous>, transform_indices = @transform_5, window_bounds = array<i64: 128, 128>}, {pipeline_mode = #tpu.pipeline_mode<synchronous>, transform_indices = @transform_6, window_bounds = array<i64: 1, 128>}, {transform_indices = @transform_7, window_bounds = array<i64: 16, 128>}]} {
    %c0 = arith.constant 0 : index
    %c0_0 = arith.constant 0 : index
    %0 = vector.load %arg1[%c0, %c0_0] : memref<16x32xf32, #tpu.memory_space<vmem>>, vector<16x32xf32>
    %1 = arith.truncf %0 : vector<16x32xf32> to vector<16x32xbf16>
    %c0_1 = arith.constant 0 : index
    %c0_2 = arith.constant 0 : index
    %2 = vector.load %arg2[%c0_1, %c0_2] : memref<32x128xbf16, #tpu.memory_space<vmem>>, vector<32x128xbf16>
    %cst = arith.constant dense<0.000000e+00> : vector<16x128xf32>
    %3 = tpu.matmul %1, %2, %cst {dimension_numbers = #tpu.dot_dimension_numbers<[1], [0], [0], [1], [0, 0, 1, 1], [], []>} : vector<16x32xbf16>, vector<32x128xbf16>, vector<16x128xf32> -> vector<16x128xf32>
    %c0_3 = arith.constant 0 : index
    %c0_4 = arith.constant 0 : index
    %4 = vector.load %arg3[%c0_3, %c0_4] : memref<1x128xf32, #tpu.memory_space<vmem>>, vector<1x128xf32>
    %5 = vector.broadcast %4 : vector<1x128xf32> to vector<16x128xf32>
    %6 = arith.addf %3, %5 : vector<16x128xf32>
    %cst_5 = arith.constant 0.000000e+00 : f32
    %7 = vector.broadcast %cst_5 : f32 to vector<16x128xf32>
    %8 = arith.maximumf %6, %7 : vector<16x128xf32>
    %9 = arith.truncf %8 : vector<16x128xf32> to vector<16x128xbf16>
    %c0_6 = arith.constant 0 : index
    %c0_7 = arith.constant 0 : index
    %10 = vector.load %arg4[%c0_6, %c0_7] : memref<128x128xbf16, #tpu.memory_space<vmem>>, vector<128x128xbf16>
    %cst_8 = arith.constant dense<0.000000e+00> : vector<16x128xf32>
    %11 = tpu.matmul %9, %10, %cst_8 {dimension_numbers = #tpu.dot_dimension_numbers<[1], [0], [0], [1], [0, 0, 1, 1], [], []>} : vector<16x128xbf16>, vector<128x128xbf16>, vector<16x128xf32> -> vector<16x128xf32>
    %c0_9 = arith.constant 0 : index
    %c0_10 = arith.constant 0 : index
    %12 = vector.load %arg5[%c0_9, %c0_10] : memref<1x128xf32, #tpu.memory_space<vmem>>, vector<1x128xf32>
    %13 = vector.broadcast %12 : vector<1x128xf32> to vector<16x128xf32>
    %14 = arith.addf %11, %13 : vector<16x128xf32>
    %cst_11 = arith.constant 0.000000e+00 : f32
    %15 = vector.broadcast %cst_11 : f32 to vector<16x128xf32>
    %16 = arith.maximumf %14, %15 : vector<16x128xf32>
    %17 = arith.truncf %16 : vector<16x128xf32> to vector<16x128xbf16>
    %c0_12 = arith.constant 0 : index
    %c0_13 = arith.constant 0 : index
    %18 = vector.load %arg6[%c0_12, %c0_13] : memref<128x128xbf16, #tpu.memory_space<vmem>>, vector<128x128xbf16>
    %cst_14 = arith.constant dense<0.000000e+00> : vector<16x128xf32>
    %19 = tpu.matmul %17, %18, %cst_14 {dimension_numbers = #tpu.dot_dimension_numbers<[1], [0], [0], [1], [0, 0, 1, 1], [], []>} : vector<16x128xbf16>, vector<128x128xbf16>, vector<16x128xf32> -> vector<16x128xf32>
    %c0_15 = arith.constant 0 : index
    %c0_16 = arith.constant 0 : index
    %20 = vector.load %arg7[%c0_15, %c0_16] : memref<1x128xf32, #tpu.memory_space<vmem>>, vector<1x128xf32>
    %21 = vector.broadcast %20 : vector<1x128xf32> to vector<16x128xf32>
    %22 = arith.addf %19, %21 : vector<16x128xf32>
    %cst_17 = arith.constant dense<0xFF800000> : vector<16xf32>
    %23 = vector.multi_reduction <maximumf>, %22, %cst_17 [1] : vector<16x128xf32> to vector<16xf32>
    %24 = vector.shape_cast %23 : vector<16xf32> to vector<16x1xf32>
    %25 = vector.broadcast %24 : vector<16x1xf32> to vector<16x128xf32>
    %26 = arith.subf %22, %25 : vector<16x128xf32>
    %27 = math.exp %26 : vector<16x128xf32>
    %cst_18 = arith.constant dense<0.000000e+00> : vector<16xf32>
    %28 = vector.multi_reduction <add>, %27, %cst_18 [1] : vector<16x128xf32> to vector<16xf32>
    %29 = vector.shape_cast %28 : vector<16xf32> to vector<16x1xf32>
    %30 = vector.broadcast %29 : vector<16x1xf32> to vector<16x128xf32>
    %31 = arith.divf %27, %30 : vector<16x128xf32>
    %32 = arith.truncf %31 : vector<16x128xf32> to vector<16x128xbf16>
    %c0_19 = arith.constant 0 : index
    %c0_20 = arith.constant 0 : index
    %33 = vector.load %arg8[%c0_19, %c0_20] : memref<16x128xbf16, #tpu.memory_space<vmem>>, vector<16x128xbf16>
    tpu.vector_store %arg8[%c0_19, %c0_20], %32 {strides = array<i32>} : memref<16x128xbf16, #tpu.memory_space<vmem>>, vector<16x128xbf16>,
    return
  }
  func.func @transform_0(%arg0: i32) -> (i32, i32) {
    %c0_i32 = arith.constant 0 : i32
    %c0_i32_0 = arith.constant 0 : i32
    return %arg0, %c0_i32 : i32, i32
  }
  func.func @transform_1(%arg0: i32) -> (i32, i32) {
    %c0_i32 = arith.constant 0 : i32
    %c0_i32_0 = arith.constant 0 : i32
    %c0_i32_1 = arith.constant 0 : i32
    return %c0_i32, %c0_i32_0 : i32, i32
  }
  func.func @transform_2(%arg0: i32) -> (i32, i32) {
    %c0_i32 = arith.constant 0 : i32
    %c0_i32_0 = arith.constant 0 : i32
    %c0_i32_1 = arith.constant 0 : i32
    return %c0_i32, %c0_i32_0 : i32, i32
  }
  func.func @transform_3(%arg0: i32) -> (i32, i32) {
    %c0_i32 = arith.constant 0 : i32
    %c0_i32_0 = arith.constant 0 : i32
    %c0_i32_1 = arith.constant 0 : i32
    return %c0_i32, %c0_i32_0 : i32, i32
  }
  func.func @transform_4(%arg0: i32) -> (i32, i32) {
    %c0_i32 = arith.constant 0 : i32
    %c0_i32_0 = arith.constant 0 : i32
    %c0_i32_1 = arith.constant 0 : i32
    return %c0_i32, %c0_i32_0 : i32, i32
  }
  func.func @transform_5(%arg0: i32) -> (i32, i32) {
    %c0_i32 = arith.constant 0 : i32
    %c0_i32_0 = arith.constant 0 : i32
    %c0_i32_1 = arith.constant 0 : i32
    return %c0_i32, %c0_i32_0 : i32, i32
  }
  func.func @transform_6(%arg0: i32) -> (i32, i32) {
    %c0_i32 = arith.constant 0 : i32
    %c0_i32_0 = arith.constant 0 : i32
    %c0_i32_1 = arith.constant 0 : i32
    return %c0_i32, %c0_i32_0 : i32, i32
  }
  func.func @transform_7(%arg0: i32) -> (i32, i32) {
    %c0_i32 = arith.constant 0 : i32
    %c0_i32_0 = arith.constant 0 : i32
    return %arg0, %c0_i32 : i32, i32
  }
}

</mosaic_0001>

<llo_original>
// kernel: policy_forward.1
$region0: #{policy_forward.1}
  #allocation0 [shape = 'u32[]', space=smem, size = 0x4, offset = 0x4, fixed_abs, tag = 'smem constant byte address 0x4 - core index']
  #allocation1 [shape = 'u32[72,128]{1,0:T(1,128)}', space=vmem, size = 0x9000, scoped, tag = 'internal scratch']
  %s0 = inlined_call_operand.vmem [shape: f32[16,32], index: 0, kind: input, shape index: {}]
  %s1 = inlined_call_operand.vmem [shape: bf16[32,128], index: 1, kind: input, shape index: {}]
  %s2 = inlined_call_operand.vmem [shape: f32[1,128], index: 2, kind: input, shape index: {}]
  %s3 = inlined_call_operand.hbm [shape: bf16[128,128], index: 3, kind: input, shape index: {}]
  %s4 = inlined_call_operand.vmem [shape: f32[1,128], index: 4, kind: input, shape index: {}]
  %s5 = inlined_call_operand.hbm [shape: bf16[128,128], index: 5, kind: input, shape index: {}]
  %s6 = inlined_call_operand.vmem [shape: f32[1,128], index: 6, kind: input, shape index: {}]
  %s7 = inlined_call_operand.vmem [shape: bf16[16,128], index: 7, kind: output, shape index: {}]
  %s8 = sld [smem:[#allocation0]]
  $region46: #{policy_forward.1} parent=0
    _
  %s10 = ssub.s32 1, %s8
  %s11 = scalar_select 0, %s10, %s8
  $region1: #{policy_forward.1} parent=0
    #allocation2 [shape = 'u8[32768]{0}', space=vmem, size = 0x8000, scoped, tag = 'input window, operand 3, single buffered']
    #allocation3 [shape = 's32[1]{0}', space=sflag, size = 0x4, scoped, tag = 'scoped memory for policy_forward.1']
    #allocation4 [shape = 'u8[32768]{0}', space=vmem, size = 0x8000, scoped, tag = 'input window, operand 5, single buffered']
    #allocation5 [shape = 's32[1]{0}', space=sflag, size = 0x4, scoped, tag = 'scoped memory for policy_forward.1']
    %12 = vsyncpa [#allocation3], 0
    %13 = vsyncpa [#allocation5], 0
    // Predicated region
    $region2: #{policy_forward.1} parent=1 // pred_check
      _
    $region3: #{policy_forward.1} parent=1 // pred_check_branch
      %15 = sbr.rel (0) target = $region5
    $region4: #{policy_forward.1} parent=1 // pred_region
      _
    $region5: #{policy_forward.1} parent=1 // pred_fallthru
      _
    // Predicated region
    $region6: #{policy_forward.1} parent=1 // pred_check
      _
    $region7: #{policy_forward.1} parent=1 // pred_check_branch
      %17 = sbr.rel (0) target = $region9
    $region8: #{policy_forward.1} parent=1 // pred_region
      _
    $region9: #{policy_forward.1} parent=1 // pred_fallthru
      _
    // Predicated region
    $region10: #{policy_forward.1} parent=1 // pred_check
      _
    $region11: #{policy_forward.1} parent=1 // pred_check_branch
      %19 = sbr.rel (0) target = $region13
    $region12: #{policy_forward.1} parent=1 // pred_region
      _
    $region13: #{policy_forward.1} parent=1 // pred_fallthru
      _
    // Predicated region
    $region14: #{policy_forward.1} parent=1 // pred_check
      _
    $region15: #{policy_forward.1} parent=1 // pred_check_branch
      %21 = sbr.rel (0) target = $region17
    $region16: #{policy_forward.1} parent=1 // pred_region
      %23 = vsyncadd [#allocation3], 0
      %s24 = sshll.u32 %s3, 4
      %s25 = int_to_ptr.hbm [resolvable:$true] %s24
      %s26 = sshll.u32 [#allocation2], 4
      %s27 = int_to_ptr.vmem [resolvable:$true] %s26
      %32 = dma.hbm_to_vmem [thread:$0]  %s25, 1024, %s27, [#allocation3], 64, 64, 4
    $region17: #{policy_forward.1} parent=1 // pred_fallthru
      _
    // Predicated region
    $region18: #{policy_forward.1} parent=1 // pred_check
      _
    $region19: #{policy_forward.1} parent=1 // pred_check_branch
      %34 = sbr.rel (0) target = $region21
    $region20: #{policy_forward.1} parent=1 // pred_region
      _
    $region21: #{policy_forward.1} parent=1 // pred_fallthru
      _
    // Predicated region
    $region22: #{policy_forward.1} parent=1 // pred_check
      _
    $region23: #{policy_forward.1} parent=1 // pred_check_branch
      %36 = sbr.rel (0) target = $region25
    $region24: #{policy_forward.1} parent=1 // pred_region
      %38 = vsyncadd [#allocation5], 0
      %s39 = sshll.u32 %s5, 4
      %s40 = int_to_ptr.hbm [resolvable:$true] %s39
      %s41 = sshll.u32 [#allocation4], 4
      %s42 = int_to_ptr.vmem [resolvable:$true] %s41
      %47 = dma.hbm_to_vmem [thread:$0]  %s40, 1024, %s42, [#allocation5], 64, 64, 4
    $region25: #{policy_forward.1} parent=1 // pred_fallthru
      _
    // Predicated region
    $region26: #{policy_forward.1} parent=1 // pred_check
      _
    $region27: #{policy_forward.1} parent=1 // pred_check_branch
      %49 = sbr.rel (0) target = $region29
    $region28: #{policy_forward.1} parent=1 // pred_region
      _
    $region29: #{policy_forward.1} parent=1 // pred_fallthru
      _
    // Predicated region
    $region30: #{policy_forward.1} parent=1 // pred_check
      _
    $region31: #{policy_forward.1} parent=1 // pred_check_branch
      %51 = sbr.rel (0) target = $region33
    $region32: #{policy_forward.1} parent=1 // pred_region
      %53 = dma.done [#allocation3], 1024
    $region33: #{policy_forward.1} parent=1 // pred_fallthru
      _
    // Predicated region
    $region34: #{policy_forward.1} parent=1 // pred_check
      _
    $region35: #{policy_forward.1} parent=1 // pred_check_branch
      %55 = sbr.rel (0) target = $region37
    $region36: #{policy_forward.1} parent=1 // pred_region
      %57 = dma.done [#allocation5], 1024
    $region37: #{policy_forward.1} parent=1 // pred_fallthru
      _
    %v59 = vld [vmem:[%s0] sm:$0xff]
    %v60 = vld [vmem:[%s0 + $0x8] sm:$0xff]
    %v61 = vpack.c.bf16 %v60, %v59
    %v62 = vld [vmem:[%s1] sm:$0xf]
    %v63 = vld [vmem:[%s1 + $0x4] sm:$0xf]
    %v64 = vld [vmem:[%s1 + $0x8] sm:$0xf]
    %v65 = vld [vmem:[%s1 + $0xc] sm:$0xf]
    %v66 = vld [vmem:[%s2] sm:$0x1]
    %v68 = vperm.slane %v66, 0
    %v74 = vunpack.c.l.b16 %v62
    %v75 = vunpack.c.l.b16 %v63
    %v76 = vunpack.c.l.b16 %v64
    %v77 = vunpack.c.l.b16 %v65
    %v78 = vpack.c.b16 %v75, %v74
    %v79 = vpack.c.b16 %v77, %v76
    %vm82 = vcmask 261120
    %v84 = vsel %vm82, %v61, 0
    %86 = vmatpush.bf16.msra.mxu0 0
    %87 = vmatpush.bf16.msra.mxu0 0
    %88 = vmatpush.bf16.msra.mxu0 0
    %89 = vmatpush.bf16.msra.mxu0 0
    %90 = vmatpush.bf16.msra.mxu0 0
    %91 = vmatpush.bf16.msra.mxu0 0
    %92 = vmatpush.bf16.msra.mxu0 %v79
    %93 = vmatpush.bf16.msra.mxu0 %v78
    %94 = vmatmul.bf16.gmra.mxu0 %v84
    %v95 = vpop.f32.mrf.mxu0
    %v96 = vadd.f32 %v68, %v95
    %v97 = vpop.f32.mrf.mxu0
    %v98 = vadd.f32 %v68, %v97
    %99 = vdwg.mxu0
    %v100 = vmax.f32 %v96, 0.0
    %v101 = vmax.f32 %v98, 0.0
    %v102 = vpack.c.bf16 %v101, %v100
    %v103 = vld [vmem:[#allocation2] sm:$0xf]
    %v104 = vld [vmem:[#allocation2 + $0x4] sm:$0xf]
    %v105 = vld [vmem:[#allocation2 + $0x8] sm:$0xf]
    %v106 = vld [vmem:[#allocation2 + $0xc] sm:$0xf]
    %v107 = vld [vmem:[#allocation2 + $0x10] sm:$0xf]
    %v108 = vld [vmem:[#allocation2 + $0x14] sm:$0xf]
    %v109 = vld [vmem:[#allocation2 + $0x18] sm:$0xf]
    %v110 = vld [vmem:[#allocation2 + $0x1c] sm:$0xf]
    %v111 = vld [vmem:[#allocation2 + $0x20] sm:$0xf]
    %v112 = vld [vmem:[#allocation2 + $0x24] sm:$0xf]
    %v113 = vld [vmem:[#allocation2 + $0x28] sm:$0xf]
    %v114 = vld [vmem:[#allocation2 + $0x2c] sm:$0xf]
    %v115 = vld [vmem:[#allocation2 + $0x30] sm:$0xf]
    %v116 = vld [vmem:[#allocation2 + $0x34] sm:$0xf]
    %v117 = vld [vmem:[#allocation2 + $0x38] sm:$0xf]
    %v118 = vld [vmem:[#allocation2 + $0x3c] sm:$0xf]
    %v119 = vld [vmem:[%s4] sm:$0x1]
    %v121 = vperm.slane %v119, 0
    %v139 = vunpack.c.l.b16 %v103
    %v140 = vunpack.c.l.b16 %v104
    %v141 = vunpack.c.l.b16 %v105
    %v142 = vunpack.c.l.b16 %v106
    %v143 = vunpack.c.l.b16 %v107
    %v144 = vunpack.c.l.b16 %v108
    %v145 = vunpack.c.l.b16 %v109
    %v146 = vunpack.c.l.b16 %v110
    %v147 = vunpack.c.l.b16 %v111
    %v148 = vunpack.c.l.b16 %v112
    %v149 = vunpack.c.l.b16 %v113
    %v150 = vunpack.c.l.b16 %v114
    %v151 = vunpack.c.l.b16 %v115
    %v152 = vunpack.c.l.b16 %v116
    %v153 = vunpack.c.l.b16 %v117
    %v154 = vunpack.c.l.b16 %v118
    %v155 = vpack.c.b16 %v140, %v139
    %v156 = vpack.c.b16 %v142, %v141
    %v157 = vpack.c.b16 %v144, %v143
    %v158 = vpack.c.b16 %v146, %v145
    %v159 = vpack.c.b16 %v148, %v147
    %v160 = vpack.c.b16 %v150, %v149
    %v161 = vpack.c.b16 %v152, %v151
    %v162 = vpack.c.b16 %v154, %v153
    %171 = vmatpush.bf16.msra.mxu0 %v162
    %172 = vmatpush.bf16.msra.mxu0 %v161
    %173 = vmatpush.bf16.msra.mxu0 %v160
    %174 = vmatpush.bf16.msra.mxu0 %v159
    %175 = vmatpush.bf16.msra.mxu0 %v158
    %176 = vmatpush.bf16.msra.mxu0 %v157
    %177 = vmatpush.bf16.msra.mxu0 %v156
    %178 = vmatpush.bf16.msra.mxu0 %v155
    %179 = vmatmul.bf16.gmra.mxu0 %v102
    %v180 = vpop.f32.mrf.mxu0
    %v181 = vadd.f32 %v121, %v180
    %v182 = vpop.f32.mrf.mxu0
    %v183 = vadd.f32 %v121, %v182
    %184 = vdwg.mxu0
    %v185 = vmax.f32 %v181, 0.0
    %v186 = vmax.f32 %v183, 0.0
    %v187 = vpack.c.bf16 %v186, %v185
    %v188 = vld [vmem:[#allocation4] sm:$0xf]
    %v189 = vld [vmem:[#allocation4 + $0x4] sm:$0xf]
    %v190 = vld [vmem:[#allocation4 + $0x8] sm:$0xf]
    %v191 = vld [vmem:[#allocation4 + $0xc] sm:$0xf]
    %v192 = vld [vmem:[#allocation4 + $0x10] sm:$0xf]
    %v193 = vld [vmem:[#allocation4 + $0x14] sm:$0xf]
    %v194 = vld [vmem:[#allocation4 + $0x18] sm:$0xf]
    %v195 = vld [vmem:[#allocation4 + $0x1c] sm:$0xf]
    %v196 = vld [vmem:[#allocation4 + $0x20] sm:$0xf]
    %v197 = vld [vmem:[#allocation4 + $0x24] sm:$0xf]
    %v198 = vld [vmem:[#allocation4 + $0x28] sm:$0xf]
    %v199 = vld [vmem:[#allocation4 + $0x2c] sm:$0xf]
    %v200 = vld [vmem:[#allocation4 + $0x30] sm:$0xf]
    %v201 = vld [vmem:[#allocation4 + $0x34] sm:$0xf]
    %v202 = vld [vmem:[#allocation4 + $0x38] sm:$0xf]
    %v203 = vld [vmem:[#allocation4 + $0x3c] sm:$0xf]
    %v204 = vld [vmem:[%s6] sm:$0x1]
    %v206 = vperm.slane %v204, 0
    %v224 = vunpack.c.l.b16 %v188
    %v225 = vunpack.c.l.b16 %v189
    %v226 = vunpack.c.l.b16 %v190
    %v227 = vunpack.c.l.b16 %v191
    %v228 = vunpack.c.l.b16 %v192
    %v229 = vunpack.c.l.b16 %v193
    %v230 = vunpack.c.l.b16 %v194
    %v231 = vunpack.c.l.b16 %v195
    %v232 = vunpack.c.l.b16 %v196
    %v233 = vunpack.c.l.b16 %v197
    %v234 = vunpack.c.l.b16 %v198
    %v235 = vunpack.c.l.b16 %v199
    %v236 = vunpack.c.l.b16 %v200
    %v237 = vunpack.c.l.b16 %v201
    %v238 = vunpack.c.l.b16 %v202
    %v239 = vunpack.c.l.b16 %v203
    %v240 = vpack.c.b16 %v225, %v224
    %v241 = vpack.c.b16 %v227, %v226
    %v242 = vpack.c.b16 %v229, %v228
    %v243 = vpack.c.b16 %v231, %v230
    %v244 = vpack.c.b16 %v233, %v232
    %v245 = vpack.c.b16 %v235, %v234
    %v246 = vpack.c.b16 %v237, %v236
    %v247 = vpack.c.b16 %v239, %v238
    %256 = vmatpush.bf16.msra.mxu0 %v247
    %257 = vmatpush.bf16.msra.mxu0 %v246
    %258 = vmatpush.bf16.msra.mxu0 %v245
    %259 = vmatpush.bf16.msra.mxu0 %v244
    %260 = vmatpush.bf16.msra.mxu0 %v243
    %261 = vmatpush.bf16.msra.mxu0 %v242
    %262 = vmatpush.bf16.msra.mxu0 %v241
    %263 = vmatpush.bf16.msra.mxu0 %v240
    %264 = vmatmul.bf16.gmra.mxu0 %v187
    %v265 = vpop.f32.mrf.mxu0
    %v266 = vadd.f32 %v206, %v265
    %v267 = vpop.f32.mrf.mxu0
    %v268 = vadd.f32 %v206, %v267
    %269 = vdwg.mxu0
    %270 = vmax.xlane.f32.xlu0 %v266
    %v271 = vpop.xlane.xlu0 %270
    %272 = vmax.xlane.f32.xlu0 %v268
    %v273 = vpop.xlane.xlu0 %272
    %v274 = vsub.f32 %v266, %v271
    %v275 = vsub.f32 %v268, %v273
    %v276 = vmul.f32 %v274, 1.442695
    %v277 = vpow.pop %v276
    %v278 = vmul.f32 %v275, 1.442695
    %v279 = vpow.pop %v278
    %280 = vadd.xlane.f32.xlu0 %v277
    %v281 = vpop.xlane.xlu0 %280
    %282 = vadd.xlane.f32.xlu0 %v279
    %v283 = vpop.xlane.xlu0 %282
    %v284 = vrcp.pop %v281
    %v285 = vmul.f32 %v281, %v284
    %v286 = vsub.f32 1.0, %v285
    %v287 = vmul.f32 %v284, %v286
    %v288 = vadd.f32 %v284, %v287
    %vm289 = vweird.f32 %v281
    %vm290 = vweird.f32 %v284
    %vm291 = vmor %vm289, %vm290
    %v292 = vsel %vm291, %v284, %v288
    %v293 = vand.u32 2147483647, %v281
    %vm294 = vcmp.eq.f32.partialorder %v293, 8.507059e+37
    %v295 = vand.u32 %v281, 2147483648
    %v296 = vor.u32 1.1754944e-38, %v295
    %v297 = vsel %vm294, %v296, %v292
    %v298 = vmul.f32 %v277, %v297
    %v299 = vrcp.pop %v283
    %v300 = vmul.f32 %v283, %v299
    %v301 = vsub.f32 1.0, %v300
    %v302 = vmul.f32 %v299, %v301
    %v303 = vadd.f32 %v299, %v302
    %vm304 = vweird.f32 %v283
    %vm305 = vweird.f32 %v299
    %vm306 = vmor %vm304, %vm305
    %v307 = vsel %vm306, %v299, %v303
    %v308 = vand.u32 2147483647, %v283
    %vm309 = vcmp.eq.f32.partialorder %v308, 8.507059e+37
    %v310 = vand.u32 %v283, 2147483648
    %v311 = vor.u32 1.1754944e-38, %v310
    %v312 = vsel %vm309, %v311, %v307
    %v313 = vmul.f32 %v279, %v312
    %v314 = vpack.c.bf16 %v298, %v298
    %v315 = vpack.c.bf16 %v313, %v313
    %316 = vst [vmem:[%s7] sm:$0xf] %v314
    %317 = vst [vmem:[%s7 + $0x4] sm:$0xf] %v315
    // Predicated region
    $region38: #{policy_forward.1} parent=1 // pred_check
      _
    $region39: #{policy_forward.1} parent=1 // pred_check_branch
      %319 = sbr.rel (0) target = $region41
    $region40: #{policy_forward.1} parent=1 // pred_region
      _
    $region41: #{policy_forward.1} parent=1 // pred_fallthru
      _
    // Predicated region
    $region42: #{policy_forward.1} parent=1 // pred_check
      _
    $region43: #{policy_forward.1} parent=1 // pred_check_branch
      %321 = sbr.rel (0) target = $region45
    $region44: #{policy_forward.1} parent=1 // pred_region
      _
    $region45: #{policy_forward.1} parent=1 // pred_fallthru
      _
    %322 = vsyncpa [#allocation3], 1
    %323 = vsyncpa [#allocation5], 1

</llo_original>
